<compile_context>
chip_gen: v7x
topology: tpu7x:2x2x1
jax: 0.10.0
libtpu: 0.0.40
codegen_flags: <defaults>
</compile_context>

<pallas_src>
import functools

import jax
import jax.numpy as jnp
from jax.experimental import pallas as pl
from jax.experimental.pallas import tpu as pltpu

EPS = 1e-5
LAMBDA_LOGVAR = -5.0


# --------------------------------------------------------------------------
# tiling helpers
# --------------------------------------------------------------------------

def _round_down(v, a):
    return (v // a) * a


def _pick_block(dim, target, align):
    """Pick a block extent for `dim`.

    Returns (block, ragged).  `block` is either the full dim (always a legal
    Pallas block extent) or a multiple of `align` (satisfying the
    (8,128)/(16,128)/(32,128) minimum-tile rule).  `ragged=True` means the
    grid is cdiv(dim, block) and the last block is clipped by Pallas."""
    if dim <= target:
        return dim, False
    target = max(target, align)
    if dim <= target:
        return dim, False
    t = _round_down(target, align)
    while t >= align:
        if dim % t == 0:
            return t, False
        t -= align
    return _round_down(target, align), True


def _vmem_budget_bytes():
    """Scoped-VMEM budget with headroom, per TPU generation."""
    try:
        cap = int(getattr(pltpu.get_tpu_info(), "vmem_capacity_bytes", 0))
    except Exception:
        cap = 0
    if cap <= 0:
        cap = 64 * 1024 * 1024          # conservative fallback: v7x per-TC VMEM
    return min((cap * 3) // 4, 96 * 1024 * 1024)   # v7x -> 48 MiB, v5e/v6e -> 96 MiB


# --------------------------------------------------------------------------
# kernels
# --------------------------------------------------------------------------

def _fused_kernel(x_ref, w_ref, b_ref, o_ref, *, inv_count, eps):
    """Single pass: stats + normalize for one channel-block resident in VMEM.

    x_ref/o_ref: (N, c_tile, HW); w_ref/b_ref: (c_tile, 1)."""
    x = x_ref[...].astype(jnp.float32)
    # Reduce over N (elementwise adds across slabs) then HW (one XLU reduce).
    s = jnp.sum(jnp.sum(x, axis=0), axis=-1, keepdims=True)        # (c_tile, 1)
    ss = jnp.sum(jnp.sum(x * x, axis=0), axis=-1, keepdims=True)   # (c_tile, 1)
    mean = s * inv_count
    # TODO(synk): E[x^2]-E[x]^2 in f32 loses precision when |mean| >> std; use a
    # shifted/Welford formulation if bit-parity with PyTorch is required.
    var = jnp.maximum(ss * inv_count - mean * mean, 0.0)
    inv_std = jax.lax.rsqrt(var + eps)                              # EUP
    scale = w_ref[...] * inv_std                                    # (c_tile, 1)
    shift = b_ref[...] - mean * scale
    o_ref[...] = (x * scale[None] + shift[None]).astype(o_ref.dtype)


def _stats_kernel(x_ref, w_ref, b_ref, scale_ref, shift_ref, sum_ref, sq_ref,
                  *, inv_count, eps, lane, num_chunks, hw, m_tile, ragged_hw):
    """Lane-dense sum / sum-of-squares accumulation + affine fold at the end.

    Grid: (C_tiles, N, HW_tiles); (N, HW) are the trailing reduction axes.
    x_ref: (1, c_tile, m_tile); w/b/scale/shift: (c_tile, 1);
    sum_ref/sq_ref: (c_tile, lane) f32 scratch (lane-dense accumulators)."""
    n = pl.program_id(1)
    m = pl.program_id(2)

    @pl.when((n == 0) & (m == 0))
    def _():
        sum_ref[...] = jnp.zeros_like(sum_ref)
        sq_ref[...] = jnp.zeros_like(sq_ref)

    x = x_ref[0]                                        # (c_tile, m_tile)
    if ragged_hw:
        limit = hw - m * m_tile                         # valid lanes this step
        base = jax.lax.broadcasted_iota(jnp.int32, sum_ref.shape, 1)

    # Plain elementwise adds into the (c_tile, lane) accumulators: no per-step
    # cross-lane (XLU) reduce, no lane-width-1 masked stores in the hot loop.
    for k in range(num_chunks):
        chunk = x[:, k * lane:(k + 1) * lane].astype(jnp.float32)
        if ragged_hw:
            chunk = jnp.where(base + (k * lane) < limit, chunk, 0.0)
        sum_ref[...] += chunk
        sq_ref[...] += chunk * chunk

    @pl.when((n == pl.num_programs(1) - 1) & (m == pl.num_programs(2) - 1))
    def _():
        s = jnp.sum(sum_ref[...], axis=-1, keepdims=True)     # single XLU reduce
        ss = jnp.sum(sq_ref[...], axis=-1, keepdims=True)
        mean = s * inv_count
        var = jnp.maximum(ss * inv_count - mean * mean, 0.0)  # biased variance
        inv_std = jax.lax.rsqrt(var + eps)
        scale = w_ref[...] * inv_std
        scale_ref[...] = scale
        shift_ref[...] = b_ref[...] - mean * scale


def _norm_kernel(x_ref, scale_ref, shift_ref, o_ref):
    """out = x * scale + shift (affine folded into per-channel scale/shift)."""
    x = x_ref[...].astype(jnp.float32)                    # (1, c_tile, m_tile)
    o_ref[...] = (x * scale_ref[...][None] + shift_ref[...][None]).astype(o_ref.dtype)


# --------------------------------------------------------------------------
# wrapper
# --------------------------------------------------------------------------

def bayesian_batch_norm_2d(x_nchw, weight, bias, *, eps=EPS,
                           c_tile_target=256, block_target_bytes=None,
                           force_tiled=False):
    """x_nchw: (N, C, H, W); weight/bias: (C,) (already sampled)."""
    N, C, H, W = x_nchw.shape
    HW = H * W
    x3d = x_nchw.reshape(N, C, HW)             # contiguous reshape: no HBM traffic

    itemsize = jnp.dtype(x3d.dtype).itemsize
    c_align = max(8, 32 // itemsize)           # sublane packing: 8 f32 / 16 bf16 / 32 int8
    budget = _vmem_budget_bytes()
    if block_target_bytes is None:
        # ~4 MiB x-blocks on v7x (48 MiB scoped budget), ~8 MiB on v5e/v6e.
        block_target_bytes = max(1 << 20, min(budget // 12, 8 << 20))

    w2d = weight.reshape(C, 1).astype(jnp.float32)
    b2d = bias.reshape(C, 1).astype(jnp.float32)
    inv_count = 1.0 / float(N * HW)

    # ---- fused single-pass path: channel-block of x resident in VMEM --------
    fused_target = min(block_target_bytes // 2, 4 << 20)
    min_c = min(C, c_align)
    row_bytes = N * HW * itemsize
    if (not force_tiled) and row_bytes * min_c <= fused_target:
        c_fused = min(C, max(min_c, _round_down(fused_target // row_bytes, c_align)))
        if C >= 2 * c_align:                   # keep >=2 C-blocks for v7x megacore
            c_fused = min(c_fused, max(c_align, _round_down(C // 2, c_align)))
        grid_c = pl.cdiv(C, c_fused)
        out3d = pl.pallas_call(
            functools.partial(_fused_kernel, inv_count=inv_count, eps=eps),
            out_shape=jax.ShapeDtypeStruct((N, C, HW), x3d.dtype),
            grid_spec=pltpu.PrefetchScalarGridSpec(
                num_scalar_prefetch=0,
                grid=(grid_c,),
                in_specs=[
                    pl.BlockSpec((N, c_fused, HW), lambda c: (0, c, 0)),
                    pl.BlockSpec((c_fused, 1), lambda c: (c, 0)),
                    pl.BlockSpec((c_fused, 1), lambda c: (c, 0)),
                ],
                out_specs=pl.BlockSpec((N, c_fused, HW), lambda c: (0, c, 0)),
            ),
            compiler_params=pltpu.CompilerParams(
                dimension_semantics=("parallel",),
                vmem_limit_bytes=budget,
            ),
            cost_estimate=pl.CostEstimate(
                flops=5 * N * C * HW, transcendentals=C,
                bytes_accessed=2 * N * C * HW * itemsize + 2 * C * 4),
        )(x3d, w2d, b2d)
        return out3d.reshape(N, C, H, W)

    # ---- tiled two-phase path ------------------------------------------------
    c_target = min(c_tile_target, C)
    if C >= 2 * c_align:                       # prefer grid_c >= 2 (v7x megacore)
        c_target = min(c_target, max(c_align, _round_down(C // 2, c_align)))
    c_tile, _ = _pick_block(C, c_target, c_align)
    grid_c = pl.cdiv(C, c_tile)

    m_target = max(128, block_target_bytes // (c_tile * itemsize))
    m_tile, ragged_hw = _pick_block(HW, m_target, 128)
    grid_m = pl.cdiv(HW, m_tile)

    lane = 128 if m_tile % 128 == 0 else m_tile      # m_tile == HW < 128 case
    num_chunks = m_tile // lane

    # ---- Phase 1: per-channel stats -> folded scale/shift --------------------
    # TODO(synk): when grid_c == 1 on v7x the second TensorCore idles during the
    # stats pass; splitting the (N, HW) reduction with per-core partial sums
    # would recover it.
    scale, shift = pl.pallas_call(
        functools.partial(_stats_kernel, inv_count=inv_count, eps=eps,
                          lane=lane, num_chunks=num_chunks, hw=HW,
                          m_tile=m_tile, ragged_hw=ragged_hw),
        out_shape=(jax.ShapeDtypeStruct((C, 1), jnp.float32),
                   jax.ShapeDtypeStruct((C, 1), jnp.float32)),
        grid_spec=pltpu.PrefetchScalarGridSpec(
            num_scalar_prefetch=0,
            grid=(grid_c, N, grid_m),
            in_specs=[
                pl.BlockSpec((1, c_tile, m_tile), lambda c, n, m: (n, c, m)),
                pl.BlockSpec((c_tile, 1), lambda c, n, m: (c, 0)),
                pl.BlockSpec((c_tile, 1), lambda c, n, m: (c, 0)),
            ],
            out_specs=(
                pl.BlockSpec((c_tile, 1), lambda c, n, m: (c, 0)),
                pl.BlockSpec((c_tile, 1), lambda c, n, m: (c, 0)),
            ),
            scratch_shapes=[pltpu.VMEM((c_tile, lane), jnp.float32),
                            pltpu.VMEM((c_tile, lane), jnp.float32)],
        ),
        compiler_params=pltpu.CompilerParams(
            dimension_semantics=("parallel", "arbitrary", "arbitrary"),
            vmem_limit_bytes=budget,
        ),
        cost_estimate=pl.CostEstimate(
            flops=3 * N * C * HW,
            transcendentals=C,
            bytes_accessed=N * C * HW * itemsize + 4 * C * 4,
        ),
    )(x3d, w2d, b2d)

    # ---- Phase 2: normalize (pure elementwise, fully parallel) ---------------
    out3d = pl.pallas_call(
        _norm_kernel,
        out_shape=jax.ShapeDtypeStruct((N, C, HW), x3d.dtype),
        grid_spec=pltpu.PrefetchScalarGridSpec(
            num_scalar_prefetch=0,
            grid=(N, grid_c, grid_m),
            in_specs=[
                pl.BlockSpec((1, c_tile, m_tile), lambda n, c, m: (n, c, m)),
                pl.BlockSpec((c_tile, 1), lambda n, c, m: (c, 0)),
                pl.BlockSpec((c_tile, 1), lambda n, c, m: (c, 0)),
            ],
            out_specs=pl.BlockSpec((1, c_tile, m_tile), lambda n, c, m: (n, c, m)),
        ),
        compiler_params=pltpu.CompilerParams(
            # every (n, c, m) output block is independent -> shard any axis.
            dimension_semantics=("parallel", "parallel", "parallel"),
            vmem_limit_bytes=budget,
        ),
        cost_estimate=pl.CostEstimate(
            flops=2 * N * C * HW,
            transcendentals=0,
            bytes_accessed=2 * N * C * HW * itemsize + 2 * C * 4,
        ),
    )(x3d, scale, shift)

    return out3d.reshape(N, C, H, W)


# ------------------------- parameter glue (plain JAX) -----------------------

def init_params(key, num_features):
    """Deterministic synthetic parameters mirroring the PyTorch __init__."""
    k_wmean, k_rm, k_rv = jax.random.split(key, 3)
    return {
        "w_mean": 0.1 * jax.random.normal(k_wmean, (num_features,), jnp.float32),
        "w_logvar": LAMBDA_LOGVAR * jnp.ones((num_features,), jnp.float32),
        "b_mean": jnp.zeros((num_features,), jnp.float32),
        "b_logvar": LAMBDA_LOGVAR * jnp.ones((num_features,), jnp.float32),
        # running buffers (unused by training-mode normalization, kept for parity)
        "running_mean": jax.random.normal(k_rm, (num_features,), jnp.float32),
        "running_var": jax.random.normal(k_rv, (num_features,), jnp.float32),
    }


def sample_affine(params, key, sample=True):
    """Reparameterized sample of weight/bias (parameter glue, not kernel work)."""
    w = params["w_mean"]
    b = params["b_mean"]
    if sample:
        kw, kb = jax.random.split(key)
        w = w + jnp.exp(0.5 * params["w_logvar"]) * jax.random.normal(kw, w.shape, w.dtype)
        b = b + jnp.exp(0.5 * params["b_logvar"]) * jax.random.normal(kb, b.shape, b.dtype)
    return w, b


def _reference_bn(x, w, b):
    x = x.astype(jnp.float32)
    mean = jnp.mean(x, axis=(0, 2, 3), keepdims=True)
    var = jnp.mean((x - mean) ** 2, axis=(0, 2, 3), keepdims=True)
    y = (x - mean) / jnp.sqrt(var + EPS)
    return y * w.reshape(1, -1, 1, 1) + b.reshape(1, -1, 1, 1)


if __name__ == "__main__":
    key = jax.random.PRNGKey(0)
    k_param, k_x, k_sample, k2, k3, k4 = jax.random.split(key, 6)

    # 1) Primary small shape (module-consistent) -> fused single-pass path.
    N, C, H, W = 2, 4, 16, 16
    x = jax.random.normal(k_x, (N, C, H, W), jnp.float32)
    params = init_params(k_param, C)
    weight, bias = sample_affine(params, k_sample, sample=True)
    out = jax.block_until_ready(bayesian_batch_norm_2d(x, weight, bias))
    assert jnp.allclose(out, _reference_bn(x, weight, bias),
                        atol=1e-4, rtol=1e-4), "mismatch (fused path)"

    # 2) Tiled two-phase path, multi-step reduction (grid_m > 1, lane chunks > 1).
    N2, C2, H2, W2 = 2, 8, 32, 64
    x2 = jax.random.normal(k2, (N2, C2, H2, W2), jnp.float32)
    p2 = init_params(k_param, C2)
    w2, b2 = sample_affine(p2, k_sample, sample=True)
    out2 = jax.block_until_ready(
        bayesian_batch_norm_2d(x2, w2, b2, force_tiled=True,
                               block_target_bytes=16 * 1024))
    assert jnp.allclose(out2, _reference_bn(x2, w2, b2),
                        atol=1e-4, rtol=1e-4), "mismatch (tiled path)"

    # 3) Ragged HW (masked stats) + ragged C tail (clipped writes).
    N3, C3, H3, W3 = 2, 12, 10, 30
    x3 = jax.random.normal(k3, (N3, C3, H3, W3), jnp.float32)
    p3 = init_params(k_param, C3)
    w3, b3 = sample_affine(p3, k_sample, sample=True)
    out3 = jax.block_until_ready(
        bayesian_batch_norm_2d(x3, w3, b3, force_tiled=True,
                               c_tile_target=8, block_target_bytes=4 * 1024))
    assert jnp.allclose(out3, _reference_bn(x3, w3, b3),
                        atol=1e-4, rtol=1e-4), "mismatch (ragged path)"

    # 4) bf16 on the wire through the tiled path (sublane alignment = 16).
    N4, C4, H4, W4 = 2, 32, 16, 16
    x4 = jax.random.normal(k4, (N4, C4, H4, W4), jnp.float32).astype(jnp.bfloat16)
    p4 = init_params(k_param, C4)
    w4, b4 = sample_affine(p4, k_sample, sample=True)
    out4 = jax.block_until_ready(
        bayesian_batch_norm_2d(x4, w4, b4, force_tiled=True,
                               block_target_bytes=16 * 1024))
    assert jnp.allclose(out4.astype(jnp.float32),
                        _reference_bn(x4, w4, b4),
                        atol=3e-2, rtol=3e-2), "mismatch (bf16 path)"

    # TODO(synk): running_mean/running_var momentum updates are a buffer side
    # effect of F.batch_norm in training mode; the forward output does not
    # depend on them, so they are not materialized here.
    print("KERNEL_OK")
</pallas_src>

<mosaic_0001>
module attributes {stable_mosaic.version = 11 : i64} {
  func.func @_fused_kernel(%arg0: i32, %arg1: memref<2x4x256xf32, #tpu.memory_space<vmem>>, %arg2: memref<4x1xf32, #tpu.memory_space<vmem>>, %arg3: memref<4x1xf32, #tpu.memory_space<vmem>>, %arg4: memref<2x4x256xf32, #tpu.memory_space<vmem>>) attributes {dimension_semantics = [#tpu.dimension_semantics<parallel>], iteration_bounds = array<i64: 1>, scalar_prefetch = 0 : i64, scratch_operands = 0 : i64, tpu.core_type = #tpu.core_type<tc>, window_params = [{transform_indices = @transform_0, window_bounds = array<i64: 2, 4, 256>}, {transform_indices = @transform_1, window_bounds = array<i64: 4, 1>}, {transform_indices = @transform_2, window_bounds = array<i64: 4, 1>}, {transform_indices = @transform_3, window_bounds = array<i64: 2, 4, 256>}]} {
    %c0 = arith.constant 0 : index
    %c0_0 = arith.constant 0 : index
    %c0_1 = arith.constant 0 : index
    %0 = vector.load %arg1[%c0, %c0_0, %c0_1] : memref<2x4x256xf32, #tpu.memory_space<vmem>>, vector<2x4x256xf32>
    %cst = arith.constant dense<0.000000e+00> : vector<4x256xf32>
    %1 = vector.multi_reduction <add>, %0, %cst [0] : vector<2x4x256xf32> to vector<4x256xf32>
    %cst_2 = arith.constant dense<0.000000e+00> : vector<4xf32>
    %2 = vector.multi_reduction <add>, %1, %cst_2 [1] : vector<4x256xf32> to vector<4xf32>
    %3 = vector.shape_cast %2 : vector<4xf32> to vector<4x1xf32>
    %4 = arith.mulf %0, %0 : vector<2x4x256xf32>
    %cst_3 = arith.constant dense<0.000000e+00> : vector<4x256xf32>
    %5 = vector.multi_reduction <add>, %4, %cst_3 [0] : vector<2x4x256xf32> to vector<4x256xf32>
    %cst_4 = arith.constant dense<0.000000e+00> : vector<4xf32>
    %6 = vector.multi_reduction <add>, %5, %cst_4 [1] : vector<4x256xf32> to vector<4xf32>
    %7 = vector.shape_cast %6 : vector<4xf32> to vector<4x1xf32>
    %cst_5 = arith.constant 0.001953125 : f32
    %8 = vector.broadcast %cst_5 : f32 to vector<4x1xf32>
    %9 = arith.mulf %3, %8 : vector<4x1xf32>
    %cst_6 = arith.constant 0.001953125 : f32
    %10 = vector.broadcast %cst_6 : f32 to vector<4x1xf32>
    %11 = arith.mulf %7, %10 : vector<4x1xf32>
    %12 = arith.mulf %9, %9 : vector<4x1xf32>
    %13 = arith.subf %11, %12 : vector<4x1xf32>
    %cst_7 = arith.constant 0.000000e+00 : f32
    %14 = vector.broadcast %cst_7 : f32 to vector<4x1xf32>
    %15 = arith.maximumf %13, %14 : vector<4x1xf32>
    %cst_8 = arith.constant 9.99999974E-6 : f32
    %16 = vector.broadcast %cst_8 : f32 to vector<4x1xf32>
    %17 = arith.addf %15, %16 : vector<4x1xf32>
    %18 = math.rsqrt %17 : vector<4x1xf32>
    %c0_9 = arith.constant 0 : index
    %c0_10 = arith.constant 0 : index
    %19 = vector.load %arg2[%c0_9, %c0_10] : memref<4x1xf32, #tpu.memory_space<vmem>>, vector<4x1xf32>
    %20 = arith.mulf %19, %18 : vector<4x1xf32>
    %c0_11 = arith.constant 0 : index
    %c0_12 = arith.constant 0 : index
    %21 = vector.load %arg3[%c0_11, %c0_12] : memref<4x1xf32, #tpu.memory_space<vmem>>, vector<4x1xf32>
    %22 = arith.mulf %9, %20 : vector<4x1xf32>
    %23 = arith.subf %21, %22 : vector<4x1xf32>
    %24 = vector.shape_cast %20 : vector<4x1xf32> to vector<1x4x1xf32>
    %25 = vector.broadcast %24 : vector<1x4x1xf32> to vector<2x4x256xf32>
    %26 = arith.mulf %0, %25 : vector<2x4x256xf32>
    %27 = vector.shape_cast %23 : vector<4x1xf32> to vector<1x4x1xf32>
    %28 = vector.broadcast %27 : vector<1x4x1xf32> to vector<2x4x256xf32>
    %29 = arith.addf %26, %28 : vector<2x4x256xf32>
    %c0_13 = arith.constant 0 : index
    %c0_14 = arith.constant 0 : index
    %c0_15 = arith.constant 0 : index
    %30 = vector.load %arg4[%c0_13, %c0_14, %c0_15] : memref<2x4x256xf32, #tpu.memory_space<vmem>>, vector<2x4x256xf32>
    tpu.vector_store %arg4[%c0_13, %c0_14, %c0_15], %29 {strides = array<i32>} : memref<2x4x256xf32, #tpu.memory_space<vmem>>, vector<2x4x256xf32>,
    return
  }
  func.func @transform_0(%arg0: i32) -> (i32, i32, i32) {
    %c0_i32 = arith.constant 0 : i32
    %c0_i32_0 = arith.constant 0 : i32
    %c0_i32_1 = arith.constant 0 : i32
    return %c0_i32, %arg0, %c0_i32_0 : i32, i32, i32
  }
  func.func @transform_1(%arg0: i32) -> (i32, i32) {
    %c0_i32 = arith.constant 0 : i32
    %c0_i32_0 = arith.constant 0 : i32
    return %arg0, %c0_i32 : i32, i32
  }
  func.func @transform_2(%arg0: i32) -> (i32, i32) {
    %c0_i32 = arith.constant 0 : i32
    %c0_i32_0 = arith.constant 0 : i32
    return %arg0, %c0_i32 : i32, i32
  }
  func.func @transform_3(%arg0: i32) -> (i32, i32, i32) {
    %c0_i32 = arith.constant 0 : i32
    %c0_i32_0 = arith.constant 0 : i32
    %c0_i32_1 = arith.constant 0 : i32
    return %c0_i32, %arg0, %c0_i32_0 : i32, i32, i32
  }
}

</mosaic_0001>

<llo_original>
// kernel: tpu_custom_call.1
$region0: #{tpu_custom_call.1}
  #allocation0 [shape = 'u32[]', space=smem, size = 0x4, offset = 0x4, fixed_abs, tag = 'smem constant byte address 0x4 - core index']
  #allocation1 [shape = 'u32[144,128]{1,0:T(1,128)}', space=vmem, size = 0x12000, scoped, tag = 'internal scratch']
  %s0 = inlined_call_operand.hbm [shape: f32[2,4,256], index: 0, kind: input, shape index: {}]
  %s1 = inlined_call_operand.vmem [shape: f32[4,1], index: 1, kind: input, shape index: {}]
  %s2 = inlined_call_operand.vmem [shape: f32[4,1], index: 2, kind: input, shape index: {}]
  %s3 = inlined_call_operand.hbm [shape: f32[2,4,256], index: 3, kind: output, shape index: {}]
  %s4 = sld [smem:[#allocation0]]
  $region26: #{tpu_custom_call.1} parent=0
    _
  %s6 = ssub.s32 1, %s4
  %s7 = scalar_select 0, %s6, %s4
  $region1: #{tpu_custom_call.1} parent=0
    #allocation2 [shape = 'u8[8192]{0}', space=vmem, size = 0x2000, scoped, tag = 'input window, operand 0, single buffered']
    #allocation3 [shape = 's32[1]{0}', space=sflag, size = 0x4, scoped, tag = 'scoped memory for tpu_custom_call.1']
    #allocation4 [shape = 's32[1]{0}', space=sflag, size = 0x4, scoped, tag = 'scoped memory for tpu_custom_call.1']
    #allocation5 [shape = 'u8[8192]{0}', space=vmem, size = 0x2000, scoped, tag = 'output window, operand 0, single buffered']
    %8 = vsyncpa [#allocation3], 0
    %9 = vsyncpa [#allocation4], 0
    // Predicated region
    $region2: #{tpu_custom_call.1} parent=1 // pred_check
      _
    $region3: #{tpu_custom_call.1} parent=1 // pred_check_branch
      %11 = sbr.rel (0) target = $region5
    $region4: #{tpu_custom_call.1} parent=1 // pred_region
      %s13 = ssub.s32 256, 256
      %14 = vsyncadd [#allocation3], %s13
      %s15 = sshll.u32 [#allocation2], 4
      %s16 = int_to_ptr.vmem [resolvable:$true] %s15
      %21 = dma.hbm_to_vmem [thread:$0]  %s0, 256, %s16, [#allocation3], 128, 128, 8
    $region5: #{tpu_custom_call.1} parent=1 // pred_fallthru
      _
    // Predicated region
    $region6: #{tpu_custom_call.1} parent=1 // pred_check
      _
    $region7: #{tpu_custom_call.1} parent=1 // pred_check_branch
      %23 = sbr.rel (0) target = $region9
    $region8: #{tpu_custom_call.1} parent=1 // pred_region
      _
    $region9: #{tpu_custom_call.1} parent=1 // pred_fallthru
      _
    // Predicated region
    $region10: #{tpu_custom_call.1} parent=1 // pred_check
      _
    $region11: #{tpu_custom_call.1} parent=1 // pred_check_branch
      %25 = sbr.rel (0) target = $region13
    $region12: #{tpu_custom_call.1} parent=1 // pred_region
      _
    $region13: #{tpu_custom_call.1} parent=1 // pred_fallthru
      _
    // Predicated region
    $region14: #{tpu_custom_call.1} parent=1 // pred_check
      _
    $region15: #{tpu_custom_call.1} parent=1 // pred_check_branch
      %27 = sbr.rel (0) target = $region17
    $region16: #{tpu_custom_call.1} parent=1 // pred_region
      %28 = dma.done [#allocation3], 256
    $region17: #{tpu_custom_call.1} parent=1 // pred_fallthru
      _
    %v29 = vld [vmem:[#allocation2] sm:$0xff]
    %v30 = vld [vmem:[#allocation2 + $0x8] sm:$0xff]
    %v33 = vcombine.high %v29, %v29
    %v34 = vcombine.high %v30, %v30
    %vm37 = vcmask 1043456
    %v38 = vsel %vm37, %v29, 0.0
    %v39 = vsel %vm37, %v30, 0.0
    %v40 = vadd.f32 %v38, %v39
    %v41 = vsel %vm37, %v33, 0.0
    %v42 = vsel %vm37, %v34, 0.0
    %v43 = vadd.f32 %v41, %v42
    %v44 = vsel %vm37, %v40, 0.0
    %v45 = vsel %vm37, %v43, 0.0
    %v46 = vadd.f32 %v44, %v45
    %47 = vadd.xlane.f32.xlu0 %v46
    %v48 = vpop.xlane.xlu0 %47
    %v49 = vmul.f32 %v29, %v29
    %v50 = vmul.f32 %v30, %v30
    %v53 = vcombine.high %v49, %v49
    %v54 = vcombine.high %v50, %v50
    %v57 = vsel %vm37, %v49, 0.0
    %v58 = vsel %vm37, %v50, 0.0
    %v59 = vadd.f32 %v57, %v58
    %v60 = vsel %vm37, %v53, 0.0
    %v61 = vsel %vm37, %v54, 0.0
    %v62 = vadd.f32 %v60, %v61
    %v63 = vsel %vm37, %v59, 0.0
    %v64 = vsel %vm37, %v62, 0.0
    %v65 = vadd.f32 %v63, %v64
    %66 = vadd.xlane.f32.xlu0 %v65
    %v67 = vpop.xlane.xlu0 %66
    %v68 = vmul.f32 %v48, 0.001953125
    %v69 = vmul.f32 %v67, 0.001953125
    %v70 = vmul.f32 %v68, %v68
    %v71 = vsub.f32 %v69, %v70
    %v72 = vmax.f32 %v71, 0.0
    %v73 = vadd.f32 %v72, 1e-05
    %v74 = vrsqrt.pop %v73
    %v75 = vld [vmem:[%s1] sm:$0xf]
    %v76 = vmul.f32 %v75, %v74
    %v77 = vld [vmem:[%s2] sm:$0xf]
    %v78 = vmul.f32 %v68, %v76
    %v79 = vsub.f32 %v77, %v78
    %81 = vset.pattern.permute.xlu0 0
    %82 = vperm.xlu0 %81, %v76
    %v83 = vpop.permute.xlu0 %82
    %v85 = vunpack.c.l.s4 839922192
    %v86 = vunpack.c.0.s8 %v85
    %v87 = vlaneseq
    %v88 = vshrl.u32 %v87, 7
    %v89 = vsub.s32 %v86, %v88
    %v90 = vrot.slane %v83, %v89
    %v92 = vmul.f32 %v29, %v90
    %v93 = vmul.f32 %v30, %v90
    %95 = vset.pattern.permute.xlu0 0
    %96 = vperm.xlu0 %95, %v79
    %v97 = vpop.permute.xlu0 %96
    %v99 = vunpack.c.l.s4 839922192
    %v100 = vunpack.c.0.s8 %v99
    %v101 = vlaneseq
    %v102 = vshrl.u32 %v101, 7
    %v103 = vsub.s32 %v100, %v102
    %v104 = vrot.slane %v97, %v103
    %v106 = vadd.f32 %v92, %v104
    %v107 = vadd.f32 %v93, %v104
    %108 = vst [vmem:[#allocation5] sm:$0xff] %v106
    %109 = vst [vmem:[#allocation5 + $0x8] sm:$0xff] %v107
    // Predicated region
    $region18: #{tpu_custom_call.1} parent=1 // pred_check
      _
    $region19: #{tpu_custom_call.1} parent=1 // pred_check_branch
      %111 = sbr.rel (0) target = $region21
    $region20: #{tpu_custom_call.1} parent=1 // pred_region
      %s113 = ssub.s32 256, 256
      %114 = vsyncadd [#allocation4], %s113
      %s115 = sshll.u32 [#allocation5], 4
      %s116 = int_to_ptr.vmem [resolvable:$true] %s115
      %121 = dma.vmem_to_hbm [thread:$0]  %s116, 256, %s3, [#allocation4], 128, 128, 8
    $region21: #{tpu_custom_call.1} parent=1 // pred_fallthru
      _
    // Predicated region
    $region22: #{tpu_custom_call.1} parent=1 // pred_check
      _
    $region23: #{tpu_custom_call.1} parent=1 // pred_check_branch
      %123 = sbr.rel (0) target = $region25
    $region24: #{tpu_custom_call.1} parent=1 // pred_region
      %124 = dma.done [#allocation4], 256
    $region25: #{tpu_custom_call.1} parent=1 // pred_fallthru
      _
    %125 = vsyncpa [#allocation3], 1
    %126 = vsyncpa [#allocation4], 1

</llo_original>
